<compile_context>
chip_gen: v7x
topology: tpu7x:2x2x1
jax: 0.10.0
libtpu: 0.0.40
codegen_flags: <defaults>
</compile_context>

<pallas_src>
import functools

import jax
import jax.numpy as jnp
from jax.experimental import pallas as pl
from jax.experimental.pallas import tpu as pltpu


def _round_up(x, m):
    return (x + m - 1) // m * m


def _row_tiling(n, target=256):
    """Pick a row tile (multiple of 8) and a padded row count divisible by it."""
    n8 = _round_up(max(n, 1), 8)
    if n8 <= target:
        return n8, n8
    return target, _round_up(n, target)


# ---------------------------------------------------------------------------
# Row-tiled Linear: o = x @ W + b   (used for the hoisted GRU x-projection)
# ---------------------------------------------------------------------------
def _linear_kernel(x_ref, w_ref, b_ref, o_ref):
    x = x_ref[...].astype(w_ref.dtype)          # bf16 weights => bf16 MXU path
    o_ref[...] = (jnp.dot(x, w_ref[...], preferred_element_type=jnp.float32)
                  + b_ref[...])


def linear_rows(x2d, w_t, b, *, tile_target=256):
    """x2d: (N, I); w_t: (I, O); b: (1, O)  ->  (N, O) float32."""
    N, I = x2d.shape
    O = w_t.shape[1]
    tile, n_pad = _row_tiling(N, tile_target)
    if n_pad != N:
        x2d = jnp.pad(x2d, ((0, n_pad - N), (0, 0)))
    out = pl.pallas_call(
        _linear_kernel,
        out_shape=jax.ShapeDtypeStruct((n_pad, O), jnp.float32),
        grid_spec=pltpu.PrefetchScalarGridSpec(
            num_scalar_prefetch=0,
            grid=(n_pad // tile,),
            in_specs=[
                pl.BlockSpec((tile, I), lambda i: (i, 0)),
                pl.BlockSpec((I, O), lambda i: (0, 0)),    # resident weight
                pl.BlockSpec((1, O), lambda i: (0, 0)),    # resident bias
            ],
            out_specs=pl.BlockSpec((tile, O), lambda i: (i, 0)),
        ),
        compiler_params=pltpu.CompilerParams(
            dimension_semantics=("parallel",)),
    )(x2d, w_t, b)
    return out[:N]


# ---------------------------------------------------------------------------
# GRU recurrence: only h @ Whh per timestep; T_BLK timesteps per grid step.
# ---------------------------------------------------------------------------
def _gru_recurrence_kernel(gi_ref, whh_ref, bhhn_ref, h0_ref, y_ref, h_carry,
                           *, hidden_size, t_blk):
    H = hidden_size

    @pl.when(pl.program_id(0) == 0)
    def _():
        h_carry[...] = h0_ref[...]

    def step(i, h):
        gi = gi_ref[i]                                       # (B, 3H) precomputed
        gh = jnp.dot(h.astype(whh_ref.dtype), whh_ref[...],
                     preferred_element_type=jnp.float32)     # (B, 3H)
        # PyTorch gate order [r | z | n]; gate math kept in fp32 (v5e-safe).
        r = jax.nn.sigmoid(gi[:, 0:H] + gh[:, 0:H])
        z = jax.nn.sigmoid(gi[:, H:2 * H] + gh[:, H:2 * H])
        n = jnp.tanh(gi[:, 2 * H:3 * H] + r * (gh[:, 2 * H:3 * H] + bhhn_ref[...]))
        h_new = (1.0 - z) * n + z * h
        y_ref[i] = h_new
        return h_new

    # Unrolled so the scheduler can overlap MXU pushes / EUP / VPU across steps.
    h_final = jax.lax.fori_loop(0, t_blk, step, h_carry[...], unroll=True)
    h_carry[...] = h_final


def gru_layer(x, wih_t, whh_t, bih, bhh, h0, *, t_blk=8):
    """x: (S, B, I); wih_t: (I, 3H); whh_t: (H, 3H); bih/bhh: (1, 3H); h0: (B, H)."""
    S, B, I = x.shape
    H = whh_t.shape[0]

    # ---- hoisted x-projection for all timesteps (one big MXU matmul).
    # Fold bih (all gates) + bhh (r,z gates) into the bias; the n-gate bhh
    # slice must stay inside the recurrence (it is multiplied by r).
    bias_gi = bih + jnp.concatenate(
        [bhh[:, :2 * H], jnp.zeros((1, H), bhh.dtype)], axis=1)
    gi = linear_rows(x.reshape(S * B, I), wih_t, bias_gi).reshape(S, B, 3 * H)
    bhh_n = bhh[:, 2 * H:]

    # ---- sequential recurrence, T_BLK timesteps per grid step.
    t_blk = max(1, min(t_blk, S))
    while S % t_blk:
        t_blk -= 1

    kernel = functools.partial(_gru_recurrence_kernel, hidden_size=H, t_blk=t_blk)
    y = pl.pallas_call(
        kernel,
        out_shape=jax.ShapeDtypeStruct((S, B, H), jnp.float32),
        grid_spec=pltpu.PrefetchScalarGridSpec(
            num_scalar_prefetch=0,
            grid=(S // t_blk,),
            in_specs=[
                pl.BlockSpec((t_blk, B, 3 * H), lambda t: (t, 0, 0)),
                pl.BlockSpec((H, 3 * H), lambda t: (0, 0)),   # resident Whh
                pl.BlockSpec((1, H), lambda t: (0, 0)),       # resident bhh_n
                pl.BlockSpec((B, H), lambda t: (0, 0)),       # resident h0
            ],
            out_specs=pl.BlockSpec((t_blk, B, H), lambda t: (t, 0, 0)),
            scratch_shapes=[pltpu.VMEM((B, H), jnp.float32)],  # carried hidden
        ),
        compiler_params=pltpu.CompilerParams(
            dimension_semantics=("arbitrary",)),  # recurrence => sequential grid
    )(gi, whh_t, bhh_n, h0)
    hT = y[-1]   # final hidden state == last timestep output (no per-step hT store)
    return y, hT


# ---------------------------------------------------------------------------
# fc head: Linear(H,1024) -> ReLU -> Dropout(eval) -> Linear(1024,C)
# Row-tiled, resident weights, lane-dense (C padded to 128) output.
# ---------------------------------------------------------------------------
def _fc_kernel(x_ref, w1_ref, b1_ref, w2_ref, b2_ref, o_ref):
    x = x_ref[...].astype(w1_ref.dtype)
    h = jnp.dot(x, w1_ref[...], preferred_element_type=jnp.float32) + b1_ref[...]
    h = jnp.maximum(h, 0.0)
    # TODO(synk): nn.Dropout is identity at inference time; no training-mode dropout.
    o_ref[...] = (jnp.dot(h.astype(w2_ref.dtype), w2_ref[...],
                          preferred_element_type=jnp.float32) + b2_ref[...])


def fc_head(x_flat, w1_t, b1, w2_t, b2, *, tile_target=256):
    """x_flat: (N, H); w1_t: (H, 1024); b1: (1, 1024); w2_t: (1024, C); b2: (1, C)."""
    N, H = x_flat.shape
    Hmid = w1_t.shape[1]
    C = w2_t.shape[1]
    Cp = _round_up(C, 128)                     # lane-dense stores (no vst.msk)
    if Cp != C:
        w2_t = jnp.pad(w2_t, ((0, 0), (0, Cp - C)))
        b2 = jnp.pad(b2, ((0, 0), (0, Cp - C)))
    tile, n_pad = _row_tiling(N, tile_target)
    if n_pad != N:
        x_flat = jnp.pad(x_flat, ((0, n_pad - N), (0, 0)))
    out = pl.pallas_call(
        _fc_kernel,
        out_shape=jax.ShapeDtypeStruct((n_pad, Cp), jnp.float32),
        grid_spec=pltpu.PrefetchScalarGridSpec(
            num_scalar_prefetch=0,
            grid=(n_pad // tile,),
            in_specs=[
                pl.BlockSpec((tile, H), lambda i: (i, 0)),
                pl.BlockSpec((H, Hmid), lambda i: (0, 0)),
                pl.BlockSpec((1, Hmid), lambda i: (0, 0)),
                pl.BlockSpec((Hmid, Cp), lambda i: (0, 0)),
                pl.BlockSpec((1, Cp), lambda i: (0, 0)),
            ],
            out_specs=pl.BlockSpec((tile, Cp), lambda i: (i, 0)),
        ),
        compiler_params=pltpu.CompilerParams(
            dimension_semantics=("parallel",)),   # shards across cores on v7x
    )(x_flat, w1_t, b1, w2_t, b2)
    return out[:N, :C]


# ---------------------------------------------------------------------------
# Full GRUDecoder forward (glue in plain JAX)
# ---------------------------------------------------------------------------
def gru_decoder_forward(params, inp, hidden, *, t_blk=8):
    """inp: (S, B, input_size); hidden: (num_layers, B, H)."""
    S, B, _ = inp.shape
    num_layers = hidden.shape[0]
    x = inp
    new_hiddens = []
    # TODO(synk): layers stay as separate pallas_calls because layer l+1's
    # hoisted x-projection needs layer l's full output sequence; a fully fused
    # multi-layer kernel would force the x-projection back into the serial loop.
    for l in range(num_layers):
        p = params["gru"][l]
        y, hT = gru_layer(x, p["wih_t"], p["whh_t"], p["bih"], p["bhh"],
                          hidden[l], t_blk=t_blk)
        new_hiddens.append(hT)
        x = y  # inter-layer dropout is eval-mode identity
    H = x.shape[-1]
    logits = fc_head(x.reshape(S * B, H), params["fc"]["w1_t"], params["fc"]["b1"],
                     params["fc"]["w2_t"], params["fc"]["b2"])
    logits = logits.reshape(S, B, -1)
    return logits, jnp.stack(new_hiddens, axis=0)


# ---------------------------------------------------------------------------
# Deterministic parameter init (PyTorch-style uniform bounds)
# ---------------------------------------------------------------------------
def init_params(key, input_size, hidden_size, num_layers, num_classes,
                weight_dtype=jnp.float32):
    # weight_dtype=jnp.bfloat16 is recommended on v6e/v7x (bf16 MXU, half the
    # weight DMA/VMEM); biases and all elementwise math stay fp32 (v5e-safe).
    params = {"gru": [], "fc": {}}
    k_gru = 1.0 / jnp.sqrt(hidden_size)
    for l in range(num_layers):
        in_sz = input_size if l == 0 else hidden_size
        key, k1, k2, k3, k4 = jax.random.split(key, 5)
        wih = jax.random.uniform(k1, (3 * hidden_size, in_sz), jnp.float32, -k_gru, k_gru)
        whh = jax.random.uniform(k2, (3 * hidden_size, hidden_size), jnp.float32, -k_gru, k_gru)
        bih = jax.random.uniform(k3, (3 * hidden_size,), jnp.float32, -k_gru, k_gru)
        bhh = jax.random.uniform(k4, (3 * hidden_size,), jnp.float32, -k_gru, k_gru)
        params["gru"].append({
            "wih_t": wih.T.astype(weight_dtype),   # (in, 3H)
            "whh_t": whh.T.astype(weight_dtype),   # (H, 3H)
            "bih": bih.reshape(1, -1),             # (1, 3H)  fp32
            "bhh": bhh.reshape(1, -1),             # (1, 3H)  fp32
        })
    key, k1, k2, k3, k4 = jax.random.split(key, 5)
    k_fc1 = 1.0 / jnp.sqrt(hidden_size)
    k_fc2 = 1.0 / jnp.sqrt(1024.0)
    w1 = jax.random.uniform(k1, (1024, hidden_size), jnp.float32, -k_fc1, k_fc1)
    b1 = jax.random.uniform(k2, (1024,), jnp.float32, -k_fc1, k_fc1)
    w2 = jax.random.uniform(k3, (num_classes, 1024), jnp.float32, -k_fc2, k_fc2)
    b2 = jax.random.uniform(k4, (num_classes,), jnp.float32, -k_fc2, k_fc2)
    params["fc"] = {"w1_t": w1.T.astype(weight_dtype), "b1": b1.reshape(1, -1),
                    "w2_t": w2.T.astype(weight_dtype), "b2": b2.reshape(1, -1)}
    return params


# ---------------------------------------------------------------------------
# Pure-JAX reference (for correctness check, fp32 weights)
# ---------------------------------------------------------------------------
def reference_forward(params, inp, hidden):
    S, B, _ = inp.shape
    num_layers = hidden.shape[0]
    x = inp
    new_hiddens = []
    for l in range(num_layers):
        p = params["gru"][l]
        H = p["whh_t"].shape[0]

        def step(h, x_t, p=p, H=H):
            gi = x_t @ p["wih_t"] + p["bih"]
            gh = h @ p["whh_t"] + p["bhh"]
            r = jax.nn.sigmoid(gi[:, :H] + gh[:, :H])
            z = jax.nn.sigmoid(gi[:, H:2 * H] + gh[:, H:2 * H])
            n = jnp.tanh(gi[:, 2 * H:] + r * gh[:, 2 * H:])
            h_new = (1.0 - z) * n + z * h
            return h_new, h_new

        hT, ys = jax.lax.scan(step, hidden[l], x)
        new_hiddens.append(hT)
        x = ys
    flat = x.reshape(S * B, -1)
    h1 = jnp.maximum(flat @ params["fc"]["w1_t"] + params["fc"]["b1"], 0.0)
    logits = h1 @ params["fc"]["w2_t"] + params["fc"]["b2"]
    return logits.reshape(S, B, -1), jnp.stack(new_hiddens, axis=0)


if __name__ == "__main__":
    seq_len, batch = 8, 2
    input_size, hidden_size = 16, 32
    num_layers, num_classes = 2, 10

    key = jax.random.PRNGKey(0)
    key, kp, kx, kh = jax.random.split(key, 4)
    params = init_params(kp, input_size, hidden_size, num_layers, num_classes)

    inp = jax.random.normal(kx, (seq_len, batch, input_size), jnp.float32)
    # init_hidden: encoder_features (B, H) repeated over layers
    encoder_features = jax.random.normal(kh, (batch, hidden_size), jnp.float32)
    hidden = jnp.tile(encoder_features[None, :, :], (num_layers, 1, 1))

    outputs, new_hidden = gru_decoder_forward(params, inp, hidden)
    outputs = jax.block_until_ready(outputs)
    new_hidden = jax.block_until_ready(new_hidden)

    ref_out, ref_hid = reference_forward(params, inp, hidden)
    assert outputs.shape == (seq_len, batch, num_classes)
    assert new_hidden.shape == (num_layers, batch, hidden_size)
    assert jnp.allclose(outputs, ref_out, atol=2e-4, rtol=2e-4)
    assert jnp.allclose(new_hidden, ref_hid, atol=2e-4, rtol=2e-4)

    # bf16-weight path (v6e/v7x recommendation): smoke test shapes / finiteness.
    params_bf16 = init_params(kp, input_size, hidden_size, num_layers, num_classes,
                              weight_dtype=jnp.bfloat16)
    out_bf16, hid_bf16 = gru_decoder_forward(params_bf16, inp, hidden)
    out_bf16 = jax.block_until_ready(out_bf16)
    assert out_bf16.shape == (seq_len, batch, num_classes)
    assert bool(jnp.all(jnp.isfinite(out_bf16)))
    assert bool(jnp.all(jnp.isfinite(hid_bf16)))

    print("KERNEL_OK")
</pallas_src>

<mosaic_0001>
module attributes {stable_mosaic.version = 11 : i64} {
  func.func @_linear_kernel(%arg0: i32, %arg1: memref<16x16xf32, #tpu.memory_space<vmem>>, %arg2: memref<16x96xf32, #tpu.memory_space<vmem>>, %arg3: memref<1x96xf32, #tpu.memory_space<vmem>>, %arg4: memref<16x96xf32, #tpu.memory_space<vmem>>) attributes {dimension_semantics = [#tpu.dimension_semantics<parallel>], iteration_bounds = array<i64: 1>, scalar_prefetch = 0 : i64, scratch_operands = 0 : i64, tpu.core_type = #tpu.core_type<tc>, window_params = [{transform_indices = @transform_0, window_bounds = array<i64: 16, 16>}, {pipeline_mode = #tpu.pipeline_mode<synchronous>, transform_indices = @transform_1, window_bounds = array<i64: 16, 96>}, {pipeline_mode = #tpu.pipeline_mode<synchronous>, transform_indices = @transform_2, window_bounds = array<i64: 1, 96>}, {transform_indices = @transform_3, window_bounds = array<i64: 16, 96>}]} {
    %c0 = arith.constant 0 : index
    %c0_0 = arith.constant 0 : index
    %0 = vector.load %arg1[%c0, %c0_0] : memref<16x16xf32, #tpu.memory_space<vmem>>, vector<16x16xf32>
    %c0_1 = arith.constant 0 : index
    %c0_2 = arith.constant 0 : index
    %1 = vector.load %arg2[%c0_1, %c0_2] : memref<16x96xf32, #tpu.memory_space<vmem>>, vector<16x96xf32>
    %cst = arith.constant dense<0.000000e+00> : vector<16x96xf32>
    %2 = tpu.matmul %0, %1, %cst {dimension_numbers = #tpu.dot_dimension_numbers<[1], [0], [0], [1], [0, 0, 1, 1], [], []>} : vector<16x16xf32>, vector<16x96xf32>, vector<16x96xf32> -> vector<16x96xf32>
    %c0_3 = arith.constant 0 : index
    %c0_4 = arith.constant 0 : index
    %3 = vector.load %arg3[%c0_3, %c0_4] : memref<1x96xf32, #tpu.memory_space<vmem>>, vector<1x96xf32>
    %4 = vector.broadcast %3 : vector<1x96xf32> to vector<16x96xf32>
    %5 = arith.addf %2, %4 : vector<16x96xf32>
    %c0_5 = arith.constant 0 : index
    %c0_6 = arith.constant 0 : index
    %6 = vector.load %arg4[%c0_5, %c0_6] : memref<16x96xf32, #tpu.memory_space<vmem>>, vector<16x96xf32>
    tpu.vector_store %arg4[%c0_5, %c0_6], %5 {strides = array<i32>} : memref<16x96xf32, #tpu.memory_space<vmem>>, vector<16x96xf32>,
    return
  }
  func.func @transform_0(%arg0: i32) -> (i32, i32) {
    %c0_i32 = arith.constant 0 : i32
    %c0_i32_0 = arith.constant 0 : i32
    return %arg0, %c0_i32 : i32, i32
  }
  func.func @transform_1(%arg0: i32) -> (i32, i32) {
    %c0_i32 = arith.constant 0 : i32
    %c0_i32_0 = arith.constant 0 : i32
    %c0_i32_1 = arith.constant 0 : i32
    return %c0_i32, %c0_i32_0 : i32, i32
  }
  func.func @transform_2(%arg0: i32) -> (i32, i32) {
    %c0_i32 = arith.constant 0 : i32
    %c0_i32_0 = arith.constant 0 : i32
    %c0_i32_1 = arith.constant 0 : i32
    return %c0_i32, %c0_i32_0 : i32, i32
  }
  func.func @transform_3(%arg0: i32) -> (i32, i32) {
    %c0_i32 = arith.constant 0 : i32
    %c0_i32_0 = arith.constant 0 : i32
    return %arg0, %c0_i32 : i32, i32
  }
}

</mosaic_0001>

<llo_original>
// kernel: tpu_custom_call.1
$region0: #{tpu_custom_call.1}
  #allocation0 [shape = 'u32[]', space=smem, size = 0x4, offset = 0x4, fixed_abs, tag = 'smem constant byte address 0x4 - core index']
  #allocation1 [shape = 'u32[144,128]{1,0:T(1,128)}', space=vmem, size = 0x12000, scoped, tag = 'internal scratch']
  %s0 = inlined_call_operand.hbm [shape: f32[16,16], index: 0, kind: input, shape index: {}]
  %s1 = inlined_call_operand.hbm [shape: f32[16,96], index: 1, kind: input, shape index: {}]
  %s2 = inlined_call_operand.vmem [shape: f32[1,96], index: 2, kind: input, shape index: {}]
  %s3 = inlined_call_operand.hbm [shape: f32[16,96], index: 3, kind: output, shape index: {}]
  %s4 = sld [smem:[#allocation0]]
  $region30: #{tpu_custom_call.1} parent=0
    _
  %s6 = ssub.s32 1, %s4
  %s7 = scalar_select 0, %s6, %s4
  $region1: #{tpu_custom_call.1} parent=0
    #allocation2 [shape = 'u8[8192]{0}', space=vmem, size = 0x2000, scoped, tag = 'input window, operand 0, single buffered']
    #allocation3 [shape = 's32[1]{0}', space=sflag, size = 0x4, scoped, tag = 'scoped memory for tpu_custom_call.1']
    #allocation4 [shape = 's32[1]{0}', space=sflag, size = 0x4, scoped, tag = 'scoped memory for tpu_custom_call.1']
    #allocation5 [shape = 'u8[8192]{0}', space=vmem, size = 0x2000, scoped, tag = 'input window, operand 1, single buffered']
    #allocation6 [shape = 's32[1]{0}', space=sflag, size = 0x4, scoped, tag = 'scoped memory for tpu_custom_call.1']
    #allocation7 [shape = 'u8[8192]{0}', space=vmem, size = 0x2000, scoped, tag = 'output window, operand 0, single buffered']
    %8 = vsyncpa [#allocation3], 0
    %9 = vsyncpa [#allocation6], 0
    %10 = vsyncpa [#allocation4], 0
    // Predicated region
    $region2: #{tpu_custom_call.1} parent=1 // pred_check
      _
    $region3: #{tpu_custom_call.1} parent=1 // pred_check_branch
      %12 = sbr.rel (0) target = $region5
    $region4: #{tpu_custom_call.1} parent=1 // pred_region
      %s14 = ssub.s32 256, 256
      %15 = vsyncadd [#allocation3], %s14
      %s16 = sshll.u32 [#allocation2], 4
      %s17 = int_to_ptr.vmem [resolvable:$true] %s16
      %22 = dma.hbm_to_vmem [thread:$0]  %s0, 256, %s17, [#allocation3], 128, 128, 8
    $region5: #{tpu_custom_call.1} parent=1 // pred_fallthru
      _
    // Predicated region
    $region6: #{tpu_custom_call.1} parent=1 // pred_check
      _
    $region7: #{tpu_custom_call.1} parent=1 // pred_check_branch
      %24 = sbr.rel (0) target = $region9
    $region8: #{tpu_custom_call.1} parent=1 // pred_region
      %s26 = ssub.s32 256, 256
      %27 = vsyncadd [#allocation6], %s26
      %s28 = sshll.u32 [#allocation5], 4
      %s29 = int_to_ptr.vmem [resolvable:$true] %s28
      %34 = dma.hbm_to_vmem [thread:$0]  %s1, 256, %s29, [#allocation6], 128, 128, 8
    $region9: #{tpu_custom_call.1} parent=1 // pred_fallthru
      _
    // Predicated region
    $region10: #{tpu_custom_call.1} parent=1 // pred_check
      _
    $region11: #{tpu_custom_call.1} parent=1 // pred_check_branch
      %36 = sbr.rel (0) target = $region13
    $region12: #{tpu_custom_call.1} parent=1 // pred_region
      _
    $region13: #{tpu_custom_call.1} parent=1 // pred_fallthru
      _
    // Predicated region
    $region14: #{tpu_custom_call.1} parent=1 // pred_check
      _
    $region15: #{tpu_custom_call.1} parent=1 // pred_check_branch
      %38 = sbr.rel (0) target = $region17
    $region16: #{tpu_custom_call.1} parent=1 // pred_region
      %39 = dma.done [#allocation3], 256
    $region17: #{tpu_custom_call.1} parent=1 // pred_fallthru
      _
    // Predicated region
    $region18: #{tpu_custom_call.1} parent=1 // pred_check
      _
    $region19: #{tpu_custom_call.1} parent=1 // pred_check_branch
      %41 = sbr.rel (0) target = $region21
    $region20: #{tpu_custom_call.1} parent=1 // pred_region
      %42 = dma.done [#allocation6], 256
    $region21: #{tpu_custom_call.1} parent=1 // pred_fallthru
      _
    %v43 = vld [vmem:[#allocation2] sm:$0xff]
    %v44 = vld [vmem:[#allocation2 + $0x8] sm:$0xff]
    %v45 = vld [vmem:[#allocation5] sm:$0xff]
    %v46 = vld [vmem:[#allocation5 + $0x8] sm:$0xff]
    %v47 = vld [vmem:[%s2] sm:$0x1]
    %v49 = vlaneseq
    %v50 = vshrl.u32 %v49, 7
    %v51 = vsub.s32 0, %v50
    %v52 = vrot.slane %v47, %v51
    %vm54 = vcmask 130048
    %v56 = vsel %vm54, %v43, 0
    %v59 = vsel %vm54, %v44, 0
    %61 = vmatprep.subr.mxu0 0.0
    %62 = vmatpush1.msra.mxu0 %v45
    %63 = vmatprep.subr.mxu0 0.0
    %64 = vmatpush1.msra.mxu0 %v46
    %65 = vmatprep.subr.mxu0 0.0
    %66 = vmatpush1.msra.mxu0 0.0
    %67 = vmatprep.subr.mxu0 0.0
    %68 = vmatpush1.msra.mxu0 0.0
    %69 = vmatprep.subr.mxu0 0.0
    %70 = vmatpush1.msra.mxu0 0.0
    %71 = vmatprep.subr.mxu0 0.0
    %72 = vmatpush1.msra.mxu0 0.0
    %73 = vmatprep.subr.mxu0 0.0
    %74 = vmatpush1.msra.mxu0 0.0
    %75 = vmatprep.subr.mxu0 0.0
    %76 = vmatpush1.msra.mxu0 0.0
    %77 = vmatprep.subr.mxu0 0.0
    %78 = vmatpush1.msra.mxu0 0.0
    %79 = vmatprep.subr.mxu0 0.0
    %80 = vmatpush1.msra.mxu0 0.0
    %81 = vmatprep.subr.mxu0 0.0
    %82 = vmatpush1.msra.mxu0 0.0
    %83 = vmatprep.subr.mxu0 0.0
    %84 = vmatpush1.msra.mxu0 0.0
    %85 = vmatprep.subr.mxu0 0.0
    %86 = vmatpush1.msra.mxu0 0.0
    %87 = vmatprep.subr.mxu0 0.0
    %88 = vmatpush1.msra.mxu0 0.0
    %89 = vmatprep.subr.mxu0 0.0
    %90 = vmatpush1.msra.mxu0 0.0
    %91 = vmatprep.subr.mxu0 0.0
    %92 = vmatpush1.msra.mxu0 0.0
    %93 = vmatprep.subr.mxu0 0.0
    %94 = vmatpush1.msra.mxu0 0.0
    %95 = vmatprep.subr.mxu0 0.0
    %96 = vmatpush1.msra.mxu0 0.0
    %97 = vmatprep.subr.mxu0 0.0
    %98 = vmatpush1.msra.mxu0 0.0
    %99 = vmatprep.subr.mxu0 0.0
    %100 = vmatpush1.msra.mxu0 0.0
    %101 = vmatprep.subr.mxu0 0.0
    %102 = vmatpush1.msra.mxu0 0.0
    %103 = vmatprep.subr.mxu0 0.0
    %104 = vmatpush1.msra.mxu0 0.0
    %105 = vmatprep.subr.mxu0 0.0
    %106 = vmatpush1.msra.mxu0 0.0
    %107 = vmatprep.subr.mxu0 0.0
    %108 = vmatpush1.msra.mxu0 0.0
    %109 = vmatprep.subr.mxu0 0.0
    %110 = vmatpush1.msra.mxu0 0.0
    %111 = vmatprep.subr.mxu0 0.0
    %112 = vmatpush1.msra.mxu0 0.0
    %113 = vmatprep.subr.mxu0 0.0
    %114 = vmatpush1.msra.mxu0 0.0
    %115 = vmatprep.subr.mxu0 0.0
    %116 = vmatpush1.msra.mxu0 0.0
    %117 = vmatprep.subr.mxu0 0.0
    %118 = vmatpush1.msra.mxu0 0.0
    %119 = vmatprep.subr.mxu0 0.0
    %120 = vmatpush1.msra.mxu0 0.0
    %121 = vmatprep.subr.mxu0 0.0
    %122 = vmatpush1.msra.mxu0 0.0
    %123 = vmatprep.subr.mxu0 0.0
    %124 = vmatpush1.msra.mxu0 0.0
    %125 = vmatprep.mubr.f32.mxu0 0.0
    %126 = vmatmul.mubr.f32.gmra.mrb[0].mxu0 %v56
    %v127 = vpop.f32.mrb[0].mxu0
    %v128 = vadd.f32 %v52, %v127
    %v129 = vpop.f32.mrb[0].mxu0
    %130 = vmatprep.mubr.f32.mxu0 0.0
    %131 = vmatmul.mubr.f32.gmra.mrb[0].mxu0 %v59
    %v132 = vpop.f32.mrb[0].mxu0
    %v133 = vadd.f32 %v52, %v132
    %v134 = vpop.f32.mrb[0].mxu0
    %135 = vdwg.mxu0
    %vm136 = vcmask 785408
    %137 = vst.msk [vmem:[#allocation7] sm:$0xff] %vm136, %v128
    %138 = vst.msk [vmem:[#allocation7 + $0x8] sm:$0xff] %vm136, %v133
    // Predicated region
    $region22: #{tpu_custom_call.1} parent=1 // pred_check
      _
    $region23: #{tpu_custom_call.1} parent=1 // pred_check_branch
      %140 = sbr.rel (0) target = $region25
    $region24: #{tpu_custom_call.1} parent=1 // pred_region
      %s142 = ssub.s32 256, 256
      %143 = vsyncadd [#allocation4], %s142
      %s144 = sshll.u32 [#allocation7], 4
      %s145 = int_to_ptr.vmem [resolvable:$true] %s144
      %150 = dma.vmem_to_hbm [thread:$0]  %s145, 256, %s3, [#allocation4], 128, 128, 8
    $region25: #{tpu_custom_call.1} parent=1 // pred_fallthru
      _
    // Predicated region
    $region26: #{tpu_custom_call.1} parent=1 // pred_check
      _
    $region27: #{tpu_custom_call.1} parent=1 // pred_check_branch
      %152 = sbr.rel (0) target = $region29
    $region28: #{tpu_custom_call.1} parent=1 // pred_region
      %153 = dma.done [#allocation4], 256
    $region29: #{tpu_custom_call.1} parent=1 // pred_fallthru
      _
    %154 = vsyncpa [#allocation3], 1
    %155 = vsyncpa [#allocation6], 1
    %156 = vsyncpa [#allocation4], 1

</llo_original>
